<compile_context>
chip_gen: v7x
topology: tpu7x:2x2x1
jax: 0.10.0
libtpu: 0.0.40
codegen_flags: <defaults>
</compile_context>

<pallas_src>
import functools
import math

import jax
import jax.numpy as jnp
from jax.experimental import pallas as pl
from jax.experimental.pallas import tpu as pltpu


# ------------------------------ tile helpers --------------------------------

_GEMM_VMEM_LIMIT = 32 * 1024 * 1024   # safe scoped limit on v5e/v6e/v7x
_SMALL_M = 256                        # launch/weight-DMA-bound regime threshold
_W_BLOCK_BYTES = 5 * 1024 * 1024      # per-buffer bf16 weight-tile cap (~10 MiB dbl-buffered)


def _pick_tile(dim, cap, align):
    """Largest tile <= cap that divides dim and is a multiple of align.
    Falls back to the full dimension (always legal as a block size)."""
    if dim <= cap:
        return dim
    t = (cap // align) * align
    while t >= align:
        if dim % t == 0:
            return t
        t -= align
    return dim


def _detect_n_split():
    """2-way N split only pays when the chip has 2 TensorCores (v7x) — HBM BW is
    per-TC there.  On single-TC chips (v5e/v6e) extra grid steps are pure overhead."""
    try:
        kind = jax.devices()[0].device_kind.lower()
    except Exception:
        return 1
    return 2 if ("v7" in kind or "7x" in kind) else 1


_N_SPLIT = _detect_n_split()


def _gemm_tiles(M, K, N, n_split=1):
    """Pick (tm, tk, tn).  Small-M regime collapses the grid to 1-2 steps;
    large-M falls back to standard MXU-friendly tiles."""
    if M <= _SMALL_M:
        tm = M
        tn = N
        if n_split > 1 and N % n_split == 0 and (N // n_split) % 128 == 0:
            tn = N // n_split
        tk = K
        while tk * tn * 2 > _W_BLOCK_BYTES and tk % 256 == 0:
            tk //= 2
        return tm, tk, tn
    return (_pick_tile(M, 256, 16), _pick_tile(K, 512, 128), _pick_tile(N, 1024, 128))


# --------------------------- tiled GEMM kernels ------------------------------

def _mm_bias_kernel(x_ref, w_ref, b_ref, o_ref, acc_ref, *, activation):
    @pl.when(pl.program_id(2) == 0)
    def _init():
        acc_ref[...] = jnp.zeros_like(acc_ref)

    acc_ref[...] += jnp.dot(x_ref[...], w_ref[...],
                            preferred_element_type=jnp.float32)

    @pl.when(pl.program_id(2) == pl.num_programs(2) - 1)
    def _store():
        acc = acc_ref[...] + b_ref[...]                     # (1, tn) f32 bias
        if activation == "gelu":
            # TODO(synk): HF BERT default is exact erf-GELU; tanh approx used here.
            c = math.sqrt(2.0 / math.pi)
            acc = 0.5 * acc * (1.0 + jnp.tanh(c * (acc + 0.044715 * acc * acc * acc)))
        o_ref[...] = acc.astype(o_ref.dtype)


def matmul_bias(x, w, b, activation=None, n_split=1, out_dtype=jnp.bfloat16):
    """y = act(x @ w + b); x:(M,K) bf16, w:(K,N) bf16, b:(1,N) f32 -> (M,N)."""
    M, K = x.shape
    N = w.shape[1]
    tm, tk, tn = _gemm_tiles(M, K, N, n_split=n_split)
    grid = (M // tm, N // tn, K // tk)
    return pl.pallas_call(
        functools.partial(_mm_bias_kernel, activation=activation),
        out_shape=jax.ShapeDtypeStruct((M, N), out_dtype),
        grid=grid,
        in_specs=[pl.BlockSpec((tm, tk), lambda i, j, k: (i, k)),
                  pl.BlockSpec((tk, tn), lambda i, j, k: (k, j)),
                  pl.BlockSpec((1, tn), lambda i, j, k: (0, j))],
        out_specs=pl.BlockSpec((tm, tn), lambda i, j, k: (i, j)),
        scratch_shapes=[pltpu.VMEM((tm, tn), jnp.float32)],
        compiler_params=pltpu.CompilerParams(
            dimension_semantics=("parallel", "parallel", "arbitrary"),
            vmem_limit_bytes=_GEMM_VMEM_LIMIT),
    )(x, w, b)


def _mm_bias_res_ln_kernel(x_ref, w_ref, b_ref, r_ref, g_ref, be_ref,
                           o_ref, acc_ref):
    @pl.when(pl.program_id(1) == 0)
    def _init():
        acc_ref[...] = jnp.zeros_like(acc_ref)

    acc_ref[...] += jnp.dot(x_ref[...], w_ref[...],
                            preferred_element_type=jnp.float32)

    @pl.when(pl.program_id(1) == pl.num_programs(1) - 1)
    def _store():
        y = acc_ref[...] + b_ref[...] + r_ref[...].astype(jnp.float32)
        mean = jnp.mean(y, axis=-1, keepdims=True)
        var = jnp.mean(jnp.square(y - mean), axis=-1, keepdims=True)
        inv = jax.lax.rsqrt(var + 1e-12)                    # BERT LayerNorm eps
        o_ref[...] = ((y - mean) * inv * g_ref[...] + be_ref[...]).astype(o_ref.dtype)


def matmul_bias_res_ln(x, w, b, res, gamma, beta, out_dtype=jnp.bfloat16):
    """y = LayerNorm(x @ w + b + res); full N (=768) kept in a single block so the
    residual-add + LayerNorm run in the GEMM epilogue (no extra HBM round trip).
    TODO(synk): the residual is re-read as bf16; keep an f32 residual stream if
    bit-exactness vs. the f32 PyTorch reference matters."""
    M, K = x.shape
    N = w.shape[1]
    if M <= _SMALL_M:
        tm, tk = M, K
        while tk * N * 2 > _W_BLOCK_BYTES and tk % 256 == 0:
            tk //= 2
    else:
        tm = _pick_tile(M, 256, 16)
        tk = _pick_tile(K, 512, 128)
    grid = (M // tm, K // tk)
    return pl.pallas_call(
        _mm_bias_res_ln_kernel,
        out_shape=jax.ShapeDtypeStruct((M, N), out_dtype),
        grid=grid,
        in_specs=[pl.BlockSpec((tm, tk), lambda i, k: (i, k)),
                  pl.BlockSpec((tk, N), lambda i, k: (k, 0)),
                  pl.BlockSpec((1, N), lambda i, k: (0, 0)),
                  pl.BlockSpec((tm, N), lambda i, k: (i, 0)),
                  pl.BlockSpec((1, N), lambda i, k: (0, 0)),
                  pl.BlockSpec((1, N), lambda i, k: (0, 0))],
        out_specs=pl.BlockSpec((tm, N), lambda i, k: (i, 0)),
        scratch_shapes=[pltpu.VMEM((tm, N), jnp.float32)],
        compiler_params=pltpu.CompilerParams(
            dimension_semantics=("parallel", "arbitrary"),
            vmem_limit_bytes=_GEMM_VMEM_LIMIT),
    )(x, w, b, res, gamma, beta)


# ------------------------------- LayerNorm -----------------------------------

def _layernorm_kernel(x_ref, g_ref, b_ref, o_ref):
    x = x_ref[...].astype(jnp.float32)
    mean = jnp.mean(x, axis=-1, keepdims=True)
    var = jnp.mean(jnp.square(x - mean), axis=-1, keepdims=True)
    inv = jax.lax.rsqrt(var + 1e-12)
    o_ref[...] = ((x - mean) * inv * g_ref[...] + b_ref[...]).astype(o_ref.dtype)


def layernorm(x, gamma, beta, out_dtype=jnp.bfloat16):
    """gamma/beta are pre-shaped (1,H) f32 (see prepare_params)."""
    M, H = x.shape
    tm = M if M <= 512 else _pick_tile(M, 512, 16)
    return pl.pallas_call(
        _layernorm_kernel,
        out_shape=jax.ShapeDtypeStruct((M, H), out_dtype),
        grid=(M // tm,),
        in_specs=[pl.BlockSpec((tm, H), lambda i: (i, 0)),
                  pl.BlockSpec((1, H), lambda i: (0, 0)),
                  pl.BlockSpec((1, H), lambda i: (0, 0))],
        out_specs=pl.BlockSpec((tm, H), lambda i: (i, 0)),
        compiler_params=pltpu.CompilerParams(dimension_semantics=("parallel",)),
    )(x, gamma, beta)


# ------------------------------- attention -----------------------------------

def _attention_kernel(qkv_ref, m_ref, o_ref, *, nh, hd):
    # qkv_ref block: (1, S, 3H) bf16 fused QKV slab for one batch element
    #                (the 1/sqrt(hd) scale is already folded into the Q half).
    # m_ref block:   (1, 1, S) f32 additive mask, shared by all heads.
    # o_ref block:   (1, S, H) bf16 lane-dense output slab (single 768-wide store).
    H = nh * hd
    mask = m_ref[0]                                         # (1, S), broadcasts over rows

    def one_head(q, k, v):
        # q @ k^T via dot_general contracting the last dims (no explicit transpose)
        s = jax.lax.dot_general(q, k, (((1,), (1,)), ((), ())),
                                preferred_element_type=jnp.float32)
        s = s + mask
        s = s - jnp.max(s, axis=-1, keepdims=True)
        p = jnp.exp(s)                                      # f32 softmax math
        ctx = jnp.dot(p.astype(v.dtype), v,
                      preferred_element_type=jnp.float32)   # (S, hd) f32
        # exact reciprocal on the tiny (S,1) denom (matches reference softmax)
        return ctx / jnp.sum(p, axis=-1, keepdims=True)

    heads = []
    # Process heads in pairs: every VMEM load below is a 128-lane-aligned (S, 128)
    # slice; the 64-lane head split happens in-register.
    for pair in range(nh // 2):
        lo = pair * 2 * hd
        q2 = qkv_ref[0, :, lo:lo + 2 * hd]
        k2 = qkv_ref[0, :, H + lo:H + lo + 2 * hd]
        v2 = qkv_ref[0, :, 2 * H + lo:2 * H + lo + 2 * hd]
        heads.append(one_head(q2[:, :hd], k2[:, :hd], v2[:, :hd]))
        heads.append(one_head(q2[:, hd:], k2[:, hd:], v2[:, hd:]))
    if nh % 2:                                              # odd head count fallback
        lo = (nh - 1) * hd
        heads.append(one_head(qkv_ref[0, :, lo:lo + hd],
                              qkv_ref[0, :, H + lo:H + lo + hd],
                              qkv_ref[0, :, 2 * H + lo:2 * H + lo + hd]))

    # Single lane-dense (S, H) store instead of nh masked 64-wide partial stores.
    o_ref[0] = jnp.concatenate(heads, axis=-1).astype(o_ref.dtype)


def attention(qkv, add_mask, nh, hd):
    """qkv: (B, S, 3H) bf16 fused slab; add_mask: (B, 1, S) f32 -> (B, S, H) bf16."""
    # TODO(synk): for S >= 128 switch to flash-style KV tiling (grid=(B,S//tq,S//tk)
    # with m/l/acc scratch) — the full SxS f32 score path spills vregs at S=128 and
    # must be sized against v7x's 64 MiB VMEM (32 MiB scoped default).
    B, S, threeH = qkv.shape
    H = nh * hd
    return pl.pallas_call(
        functools.partial(_attention_kernel, nh=nh, hd=hd),
        out_shape=jax.ShapeDtypeStruct((B, S, H), qkv.dtype),
        grid=(B,),
        in_specs=[pl.BlockSpec((1, S, threeH), lambda b: (b, 0, 0)),
                  pl.BlockSpec((1, 1, S), lambda b: (b, 0, 0))],
        out_specs=pl.BlockSpec((1, S, H), lambda b: (b, 0, 0)),
        compiler_params=pltpu.CompilerParams(dimension_semantics=("parallel",)),
    )(qkv, add_mask)


# ------------------------- parameters (synthetic) -----------------------------

def init_params(key, cfg):
    H, inter = cfg["H"], cfg["inter"]
    keys = iter(jax.random.split(key, 16 + 16 * cfg["layers"]))

    def nrm(shape):
        return 0.02 * jax.random.normal(next(keys), shape, jnp.float32)

    params = {
        "word_emb": nrm((cfg["vocab"], H)),
        "pos_emb": nrm((cfg["max_pos"], H)),
        "type_emb": nrm((cfg["type_vocab"], H)),
        "emb_ln_g": jnp.ones((H,), jnp.float32),
        "emb_ln_b": jnp.zeros((H,), jnp.float32),
        "layers": [],
        # BERT pooler (part of BertModel output; classifier uses raw CLS per spec)
        "wp": nrm((H, H)), "bp": jnp.zeros((H,), jnp.float32),
        # torch.nn.Linear(768, num_labels)
        "wc": nrm((H, cfg["num_labels"])), "bc": jnp.zeros((cfg["num_labels"],), jnp.float32),
    }
    for _ in range(cfg["layers"]):
        params["layers"].append({
            "wq": nrm((H, H)), "bq": jnp.zeros((H,), jnp.float32),
            "wk": nrm((H, H)), "bk": jnp.zeros((H,), jnp.float32),
            "wv": nrm((H, H)), "bv": jnp.zeros((H,), jnp.float32),
            "wo": nrm((H, H)), "bo": jnp.zeros((H,), jnp.float32),
            "ln1_g": jnp.ones((H,), jnp.float32), "ln1_b": jnp.zeros((H,), jnp.float32),
            "w1": nrm((H, inter)), "b1": jnp.zeros((inter,), jnp.float32),
            "w2": nrm((inter, H)), "b2": jnp.zeros((H,), jnp.float32),
            "ln2_g": jnp.ones((H,), jnp.float32), "ln2_b": jnp.zeros((H,), jnp.float32),
        })
    return params


def prepare_params(raw, cfg):
    """Kernel-friendly re-layout done ONCE at prep time:
      * fused QKV weight with the 1/sqrt(hd) attention scale folded into Q (exact),
      * bf16 MXU weights,
      * all (1,N)-shaped f32 bias / gamma / beta tensors pre-reshaped/cast."""
    H, inter = cfg["H"], cfg["inter"]
    scale = 1.0 / math.sqrt(cfg["head_dim"])

    def row(v):
        return v.reshape(1, -1).astype(jnp.float32)

    p = {
        "word_emb": raw["word_emb"], "pos_emb": raw["pos_emb"], "type_emb": raw["type_emb"],
        "emb_ln_g": row(raw["emb_ln_g"]), "emb_ln_b": row(raw["emb_ln_b"]),
        "wp": raw["wp"], "bp": raw["bp"], "wc": raw["wc"], "bc": raw["bc"],
        "layers": [],
    }
    for l in raw["layers"]:
        p["layers"].append({
            "w_qkv": jnp.concatenate([l["wq"] * scale, l["wk"], l["wv"]],
                                     axis=1).astype(jnp.bfloat16),
            "b_qkv": row(jnp.concatenate([l["bq"] * scale, l["bk"], l["bv"]])),
            "wo": l["wo"].astype(jnp.bfloat16), "bo": row(l["bo"]),
            "ln1_g": row(l["ln1_g"]), "ln1_b": row(l["ln1_b"]),
            "w1": l["w1"].astype(jnp.bfloat16), "b1": row(l["b1"]),
            "w2": l["w2"].astype(jnp.bfloat16), "b2": row(l["b2"]),
            "ln2_g": row(l["ln2_g"]), "ln2_b": row(l["ln2_b"]),
        })
    return p


# ------------------------------- forward pass ---------------------------------

def bert_classifier_forward(params, input_ids, attention_mask, cfg, task=None):
    B, S = input_ids.shape
    H, nh, hd = cfg["H"], cfg["heads"], cfg["head_dim"]

    # --- embeddings (gathers are XLA glue; LayerNorm is a Pallas kernel) ---
    pos_ids = jnp.arange(S, dtype=jnp.int32)
    x = (params["word_emb"][input_ids]
         + params["pos_emb"][pos_ids][None, :, :]
         + params["type_emb"][jnp.zeros((B, S), jnp.int32)])
    h = layernorm(x.reshape(B * S, H), params["emb_ln_g"], params["emb_ln_b"])  # bf16

    # HF-style extended additive mask, (B,1,S) — NOT replicated per head.
    add_mask = ((1.0 - attention_mask.astype(jnp.float32)) * (-1e9)).reshape(B, 1, S)

    for lp in params["layers"]:
        # fused Q|K|V projection: one GEMM, (B*S, 3H) bf16 slab
        qkv = matmul_bias(h, lp["w_qkv"], lp["b_qkv"], n_split=_N_SPLIT)
        # attention reads the fused slab directly and writes a lane-dense (B,S,H) slab
        ctx = attention(qkv.reshape(B, S, 3 * H), add_mask, nh, hd)
        # output projection + residual + LayerNorm fused in one GEMM epilogue
        h = matmul_bias_res_ln(ctx.reshape(B * S, H), lp["wo"], lp["bo"],
                               h, lp["ln1_g"], lp["ln1_b"])
        # FFN: GELU fused into the up-projection, residual+LN fused into the down-proj
        inter = matmul_bias(h, lp["w1"], lp["b1"], activation="gelu", n_split=_N_SPLIT)
        h = matmul_bias_res_ln(inter, lp["w2"], lp["b2"],
                               h, lp["ln2_g"], lp["ln2_b"])

    last_hidden = h.reshape(B, S, H).astype(jnp.float32)
    cls = last_hidden[:, 0, :]                              # == [:, 0, :].view(-1, 768)
    # Pooler / classifier head in plain jnp: (2,768)x(768,·) with num_labels=3 is
    # far below a single vreg; a Pallas launch would be pure overhead.
    pooler = jnp.tanh(cls @ params["wp"] + params["bp"])
    logits = cls @ params["wc"] + params["bc"]
    if task == "stsb":
        logits = jnp.clip(jax.nn.sigmoid(logits) * 5.5, 0.0, 5.0)

    return {"hidden_layer": {"last_hidden_state": last_hidden,
                             "pooler_output": pooler},
            "logits": logits}


# ----------------------------------- main --------------------------------------

if __name__ == "__main__":
    cfg = dict(vocab=1000, max_pos=64, type_vocab=2,
               H=768, heads=12, head_dim=64, inter=3072,
               layers=2, num_labels=3)

    key = jax.random.PRNGKey(0)
    k_param, k_ids = jax.random.split(key)
    params = prepare_params(init_params(k_param, cfg), cfg)

    B, S = 2, 16
    input_ids = jax.random.randint(k_ids, (B, S), 0, cfg["vocab"], dtype=jnp.int32)
    # second sequence is padded for the last 6 positions to exercise the mask
    attention_mask = jnp.array([[1] * S, [1] * (S - 6) + [0] * 6], dtype=jnp.int32)

    out = bert_classifier_forward(params, input_ids, attention_mask, cfg, task=None)
    jax.block_until_ready(out["logits"])
    jax.block_until_ready(out["hidden_layer"]["last_hidden_state"])

    assert out["logits"].shape == (B, cfg["num_labels"])
    assert out["hidden_layer"]["last_hidden_state"].shape == (B, S, cfg["H"])
    assert out["hidden_layer"]["pooler_output"].shape == (B, cfg["H"])
    assert jnp.all(jnp.isfinite(out["logits"]))
    print("KERNEL_OK")
</pallas_src>

<mosaic_0001>
module attributes {stable_mosaic.version = 11 : i64} {
  func.func @_layernorm_kernel(%arg0: i32, %arg1: memref<32x768xf32, #tpu.memory_space<vmem>>, %arg2: memref<1x768xf32, #tpu.memory_space<vmem>>, %arg3: memref<1x768xf32, #tpu.memory_space<vmem>>, %arg4: memref<32x768xbf16, #tpu.memory_space<vmem>>) attributes {dimension_semantics = [#tpu.dimension_semantics<parallel>], iteration_bounds = array<i64: 1>, scalar_prefetch = 0 : i64, scratch_operands = 0 : i64, tpu.core_type = #tpu.core_type<tc>, window_params = [{transform_indices = @transform_0, window_bounds = array<i64: 32, 768>}, {pipeline_mode = #tpu.pipeline_mode<synchronous>, transform_indices = @transform_1, window_bounds = array<i64: 1, 768>}, {pipeline_mode = #tpu.pipeline_mode<synchronous>, transform_indices = @transform_2, window_bounds = array<i64: 1, 768>}, {transform_indices = @transform_3, window_bounds = array<i64: 32, 768>}]} {
    %c0 = arith.constant 0 : index
    %c0_0 = arith.constant 0 : index
    %0 = vector.load %arg1[%c0, %c0_0] : memref<32x768xf32, #tpu.memory_space<vmem>>, vector<32x768xf32>
    %cst = arith.constant dense<0.000000e+00> : vector<32xf32>
    %1 = vector.multi_reduction <add>, %0, %cst [1] : vector<32x768xf32> to vector<32xf32>
    %2 = vector.shape_cast %1 : vector<32xf32> to vector<32x1xf32>
    %cst_1 = arith.constant 7.680000e+02 : f32
    %3 = vector.broadcast %cst_1 : f32 to vector<32x1xf32>
    %4 = arith.divf %2, %3 : vector<32x1xf32>
    %5 = vector.broadcast %4 : vector<32x1xf32> to vector<32x768xf32>
    %6 = arith.subf %0, %5 : vector<32x768xf32>
    %7 = arith.mulf %6, %6 : vector<32x768xf32>
    %cst_2 = arith.constant dense<0.000000e+00> : vector<32xf32>
    %8 = vector.multi_reduction <add>, %7, %cst_2 [1] : vector<32x768xf32> to vector<32xf32>
    %9 = vector.shape_cast %8 : vector<32xf32> to vector<32x1xf32>
    %cst_3 = arith.constant 7.680000e+02 : f32
    %10 = vector.broadcast %cst_3 : f32 to vector<32x1xf32>
    %11 = arith.divf %9, %10 : vector<32x1xf32>
    %cst_4 = arith.constant 9.99999996E-13 : f32
    %12 = vector.broadcast %cst_4 : f32 to vector<32x1xf32>
    %13 = arith.addf %11, %12 : vector<32x1xf32>
    %14 = math.rsqrt %13 : vector<32x1xf32>
    %15 = vector.broadcast %4 : vector<32x1xf32> to vector<32x768xf32>
    %16 = arith.subf %0, %15 : vector<32x768xf32>
    %17 = vector.broadcast %14 : vector<32x1xf32> to vector<32x768xf32>
    %18 = arith.mulf %16, %17 : vector<32x768xf32>
    %c0_5 = arith.constant 0 : index
    %c0_6 = arith.constant 0 : index
    %19 = vector.load %arg2[%c0_5, %c0_6] : memref<1x768xf32, #tpu.memory_space<vmem>>, vector<1x768xf32>
    %20 = vector.broadcast %19 : vector<1x768xf32> to vector<32x768xf32>
    %21 = arith.mulf %18, %20 : vector<32x768xf32>
    %c0_7 = arith.constant 0 : index
    %c0_8 = arith.constant 0 : index
    %22 = vector.load %arg3[%c0_7, %c0_8] : memref<1x768xf32, #tpu.memory_space<vmem>>, vector<1x768xf32>
    %23 = vector.broadcast %22 : vector<1x768xf32> to vector<32x768xf32>
    %24 = arith.addf %21, %23 : vector<32x768xf32>
    %25 = arith.truncf %24 : vector<32x768xf32> to vector<32x768xbf16>
    %c0_9 = arith.constant 0 : index
    %c0_10 = arith.constant 0 : index
    %26 = vector.load %arg4[%c0_9, %c0_10] : memref<32x768xbf16, #tpu.memory_space<vmem>>, vector<32x768xbf16>
    tpu.vector_store %arg4[%c0_9, %c0_10], %25 {strides = array<i32>} : memref<32x768xbf16, #tpu.memory_space<vmem>>, vector<32x768xbf16>,
    return
  }
  func.func @transform_0(%arg0: i32) -> (i32, i32) {
    %c0_i32 = arith.constant 0 : i32
    %c0_i32_0 = arith.constant 0 : i32
    return %arg0, %c0_i32 : i32, i32
  }
  func.func @transform_1(%arg0: i32) -> (i32, i32) {
    %c0_i32 = arith.constant 0 : i32
    %c0_i32_0 = arith.constant 0 : i32
    %c0_i32_1 = arith.constant 0 : i32
    return %c0_i32, %c0_i32_0 : i32, i32
  }
  func.func @transform_2(%arg0: i32) -> (i32, i32) {
    %c0_i32 = arith.constant 0 : i32
    %c0_i32_0 = arith.constant 0 : i32
    %c0_i32_1 = arith.constant 0 : i32
    return %c0_i32, %c0_i32_0 : i32, i32
  }
  func.func @transform_3(%arg0: i32) -> (i32, i32) {
    %c0_i32 = arith.constant 0 : i32
    %c0_i32_0 = arith.constant 0 : i32
    return %arg0, %c0_i32 : i32, i32
  }
}

</mosaic_0001>

<llo_original>
// kernel: tpu_custom_call.1
$region0: #{tpu_custom_call.1}
  #allocation0 [shape = 'u32[]', space=smem, size = 0x4, offset = 0x4, fixed_abs, tag = 'smem constant byte address 0x4 - core index']
  #allocation1 [shape = 'u32[144,128]{1,0:T(1,128)}', space=vmem, size = 0x12000, scoped, tag = 'internal scratch']
  %s0 = inlined_call_operand.hbm [shape: f32[32,768], index: 0, kind: input, shape index: {}]
  %s1 = inlined_call_operand.hbm [shape: f32[1,768], index: 1, kind: input, shape index: {}]
  %s2 = inlined_call_operand.vmem [shape: f32[1,768], index: 2, kind: input, shape index: {}]
  %s3 = inlined_call_operand.hbm [shape: bf16[32,768], index: 3, kind: output, shape index: {}]
  %s4 = sld [smem:[#allocation0]]
  $region30: #{tpu_custom_call.1} parent=0
    _
  %s6 = ssub.s32 1, %s4
  %s7 = scalar_select 0, %s6, %s4
  $region1: #{tpu_custom_call.1} parent=0
    #allocation2 [shape = 'u8[98304]{0}', space=vmem, size = 0x18000, scoped, tag = 'input window, operand 0, single buffered']
    #allocation3 [shape = 's32[1]{0}', space=sflag, size = 0x4, scoped, tag = 'scoped memory for tpu_custom_call.1']
    #allocation4 [shape = 's32[1]{0}', space=sflag, size = 0x4, scoped, tag = 'scoped memory for tpu_custom_call.1']
    #allocation5 [shape = 'u8[3072]{0}', space=vmem, size = 0xc00, scoped, tag = 'input window, operand 1, single buffered']
    #allocation6 [shape = 's32[1]{0}', space=sflag, size = 0x4, scoped, tag = 'scoped memory for tpu_custom_call.1']
    #allocation7 [shape = 'u8[49152]{0}', space=vmem, size = 0xc000, scoped, tag = 'output window, operand 0, single buffered']
    %8 = vsyncpa [#allocation3], 0
    %9 = vsyncpa [#allocation6], 0
    %10 = vsyncpa [#allocation4], 0
    // Predicated region
    $region2: #{tpu_custom_call.1} parent=1 // pred_check
      _
    $region3: #{tpu_custom_call.1} parent=1 // pred_check_branch
      %12 = sbr.rel (0) target = $region5
    $region4: #{tpu_custom_call.1} parent=1 // pred_region
      %s14 = ssub.s32 3072, 3072
      %15 = vsyncadd [#allocation3], %s14
      %s16 = sshll.u32 [#allocation2], 4
      %s17 = int_to_ptr.vmem [resolvable:$true] %s16
      %22 = dma.hbm_to_vmem [thread:$0]  %s0, 3072, %s17, [#allocation3], 768, 768, 48
    $region5: #{tpu_custom_call.1} parent=1 // pred_fallthru
      _
    // Predicated region
    $region6: #{tpu_custom_call.1} parent=1 // pred_check
      _
    $region7: #{tpu_custom_call.1} parent=1 // pred_check_branch
      %24 = sbr.rel (0) target = $region9
    $region8: #{tpu_custom_call.1} parent=1 // pred_region
      %s26 = ssub.s32 96, 96
      %27 = vsyncadd [#allocation6], %s26
      %s29 = sshll.u32 [#allocation5], 4
      %s30 = int_to_ptr.vmem [resolvable:$true] %s29
      %32 = dma.hbm_to_vmem [thread:$0]  %s1, 96, %s30, [#allocation6]
    $region9: #{tpu_custom_call.1} parent=1 // pred_fallthru
      _
    // Predicated region
    $region10: #{tpu_custom_call.1} parent=1 // pred_check
      _
    $region11: #{tpu_custom_call.1} parent=1 // pred_check_branch
      %34 = sbr.rel (0) target = $region13
    $region12: #{tpu_custom_call.1} parent=1 // pred_region
      _
    $region13: #{tpu_custom_call.1} parent=1 // pred_fallthru
      _
    // Predicated region
    $region14: #{tpu_custom_call.1} parent=1 // pred_check
      _
    $region15: #{tpu_custom_call.1} parent=1 // pred_check_branch
      %36 = sbr.rel (0) target = $region17
    $region16: #{tpu_custom_call.1} parent=1 // pred_region
      %37 = dma.done [#allocation3], 3072
    $region17: #{tpu_custom_call.1} parent=1 // pred_fallthru
      _
    // Predicated region
    $region18: #{tpu_custom_call.1} parent=1 // pred_check
      _
    $region19: #{tpu_custom_call.1} parent=1 // pred_check_branch
      %39 = sbr.rel (0) target = $region21
    $region20: #{tpu_custom_call.1} parent=1 // pred_region
      %40 = dma.done [#allocation6], 96
    $region21: #{tpu_custom_call.1} parent=1 // pred_fallthru
      _
    %v41 = vld [vmem:[#allocation2] sm:$0xff]
    %v42 = vld [vmem:[#allocation2 + $0x8] sm:$0xff]
    %v43 = vld [vmem:[#allocation2 + $0x10] sm:$0xff]
    %v44 = vld [vmem:[#allocation2 + $0x18] sm:$0xff]
    %v45 = vld [vmem:[#allocation2 + $0x20] sm:$0xff]
    %v46 = vld [vmem:[#allocation2 + $0x28] sm:$0xff]
    %v47 = vld [vmem:[#allocation2 + $0x30] sm:$0xff]
    %v48 = vld [vmem:[#allocation2 + $0x38] sm:$0xff]
    %v49 = vld [vmem:[#allocation2 + $0x40] sm:$0xff]
    %v50 = vld [vmem:[#allocation2 + $0x48] sm:$0xff]
    %v51 = vld [vmem:[#allocation2 + $0x50] sm:$0xff]
    %v52 = vld [vmem:[#allocation2 + $0x58] sm:$0xff]
    %v53 = vld [vmem:[#allocation2 + $0x60] sm:$0xff]
    %v54 = vld [vmem:[#allocation2 + $0x68] sm:$0xff]
    %v55 = vld [vmem:[#allocation2 + $0x70] sm:$0xff]
    %v56 = vld [vmem:[#allocation2 + $0x78] sm:$0xff]
    %v57 = vld [vmem:[#allocation2 + $0x80] sm:$0xff]
    %v58 = vld [vmem:[#allocation2 + $0x88] sm:$0xff]
    %v59 = vld [vmem:[#allocation2 + $0x90] sm:$0xff]
    %v60 = vld [vmem:[#allocation2 + $0x98] sm:$0xff]
    %v61 = vld [vmem:[#allocation2 + $0xa0] sm:$0xff]
    %v62 = vld [vmem:[#allocation2 + $0xa8] sm:$0xff]
    %v63 = vld [vmem:[#allocation2 + $0xb0] sm:$0xff]
    %v64 = vld [vmem:[#allocation2 + $0xb8] sm:$0xff]
    %v65 = vadd.f32 %v41, %v42
    %v66 = vadd.f32 %v65, %v43
    %v67 = vadd.f32 %v66, %v44
    %v68 = vadd.f32 %v67, %v45
    %v69 = vadd.f32 %v68, %v46
    %70 = vadd.xlane.f32.xlu0 %v69
    %v71 = vpop.xlane.xlu0 %70
    %v72 = vadd.f32 %v47, %v48
    %v73 = vadd.f32 %v72, %v49
    %v74 = vadd.f32 %v73, %v50
    %v75 = vadd.f32 %v74, %v51
    %v76 = vadd.f32 %v75, %v52
    %77 = vadd.xlane.f32.xlu0 %v76
    %v78 = vpop.xlane.xlu0 %77
    %v79 = vadd.f32 %v53, %v54
    %v80 = vadd.f32 %v79, %v55
    %v81 = vadd.f32 %v80, %v56
    %v82 = vadd.f32 %v81, %v57
    %v83 = vadd.f32 %v82, %v58
    %84 = vadd.xlane.f32.xlu0 %v83
    %v85 = vpop.xlane.xlu0 %84
    %v86 = vadd.f32 %v59, %v60
    %v87 = vadd.f32 %v86, %v61
    %v88 = vadd.f32 %v87, %v62
    %v89 = vadd.f32 %v88, %v63
    %v90 = vadd.f32 %v89, %v64
    %91 = vadd.xlane.f32.xlu0 %v90
    %v92 = vpop.xlane.xlu0 %91
    %v93 = vrcp.pop 768.0
    %v94 = vmul.f32 %v71, %v93
    %v95 = vmul.f32 %v78, %v93
    %v96 = vmul.f32 %v85, %v93
    %v97 = vmul.f32 %v92, %v93
    %v98 = vsub.f32 %v41, %v94
    %v99 = vsub.f32 %v42, %v94
    %v100 = vsub.f32 %v43, %v94
    %v101 = vsub.f32 %v44, %v94
    %v102 = vsub.f32 %v45, %v94
    %v103 = vsub.f32 %v46, %v94
    %v104 = vsub.f32 %v47, %v95
    %v105 = vsub.f32 %v48, %v95
    %v106 = vsub.f32 %v49, %v95
    %v107 = vsub.f32 %v50, %v95
    %v108 = vsub.f32 %v51, %v95
    %v109 = vsub.f32 %v52, %v95
    %v110 = vsub.f32 %v53, %v96
    %v111 = vsub.f32 %v54, %v96
    %v112 = vsub.f32 %v55, %v96
    %v113 = vsub.f32 %v56, %v96
    %v114 = vsub.f32 %v57, %v96
    %v115 = vsub.f32 %v58, %v96
    %v116 = vsub.f32 %v59, %v97
    %v117 = vsub.f32 %v60, %v97
    %v118 = vsub.f32 %v61, %v97
    %v119 = vsub.f32 %v62, %v97
    %v120 = vsub.f32 %v63, %v97
    %v121 = vsub.f32 %v64, %v97
    %v122 = vmul.f32 %v98, %v98
    %v123 = vmul.f32 %v99, %v99
    %v124 = vmul.f32 %v100, %v100
    %v125 = vmul.f32 %v101, %v101
    %v126 = vmul.f32 %v102, %v102
    %v127 = vmul.f32 %v103, %v103
    %v128 = vmul.f32 %v104, %v104
    %v129 = vmul.f32 %v105, %v105
    %v130 = vmul.f32 %v106, %v106
    %v131 = vmul.f32 %v107, %v107
    %v132 = vmul.f32 %v108, %v108
    %v133 = vmul.f32 %v109, %v109
    %v134 = vmul.f32 %v110, %v110
    %v135 = vmul.f32 %v111, %v111
    %v136 = vmul.f32 %v112, %v112
    %v137 = vmul.f32 %v113, %v113
    %v138 = vmul.f32 %v114, %v114
    %v139 = vmul.f32 %v115, %v115
    %v140 = vmul.f32 %v116, %v116
    %v141 = vmul.f32 %v117, %v117
    %v142 = vmul.f32 %v118, %v118
    %v143 = vmul.f32 %v119, %v119
    %v144 = vmul.f32 %v120, %v120
    %v145 = vmul.f32 %v121, %v121
    %v146 = vadd.f32 %v122, %v123
    %v147 = vadd.f32 %v146, %v124
    %v148 = vadd.f32 %v147, %v125
    %v149 = vadd.f32 %v148, %v126
    %v150 = vadd.f32 %v149, %v127
    %151 = vadd.xlane.f32.xlu0 %v150
    %v152 = vpop.xlane.xlu0 %151
    %v153 = vadd.f32 %v128, %v129
    %v154 = vadd.f32 %v153, %v130
    %v155 = vadd.f32 %v154, %v131
    %v156 = vadd.f32 %v155, %v132
    %v157 = vadd.f32 %v156, %v133
    %158 = vadd.xlane.f32.xlu0 %v157
    %v159 = vpop.xlane.xlu0 %158
    %v160 = vadd.f32 %v134, %v135
    %v161 = vadd.f32 %v160, %v136
    %v162 = vadd.f32 %v161, %v137
    %v163 = vadd.f32 %v162, %v138
    %v164 = vadd.f32 %v163, %v139
    %165 = vadd.xlane.f32.xlu0 %v164
    %v166 = vpop.xlane.xlu0 %165
    %v167 = vadd.f32 %v140, %v141
    %v168 = vadd.f32 %v167, %v142
    %v169 = vadd.f32 %v168, %v143
    %v170 = vadd.f32 %v169, %v144
    %v171 = vadd.f32 %v170, %v145
    %172 = vadd.xlane.f32.xlu0 %v171
    %v173 = vpop.xlane.xlu0 %172
    %v174 = vmul.f32 %v152, %v93
    %v175 = vmul.f32 %v159, %v93
    %v176 = vmul.f32 %v166, %v93
    %v177 = vmul.f32 %v173, %v93
    %v178 = vadd.f32 %v174, 1e-12
    %v179 = vadd.f32 %v175, 1e-12
    %v180 = vadd.f32 %v176, 1e-12
    %v181 = vadd.f32 %v177, 1e-12
    %v182 = vrsqrt.pop %v178
    %v183 = vrsqrt.pop %v179
    %v184 = vrsqrt.pop %v180
    %v185 = vrsqrt.pop %v181
    %v186 = vmul.f32 %v98, %v182
    %v187 = vmul.f32 %v99, %v182
    %v188 = vmul.f32 %v100, %v182
    %v189 = vmul.f32 %v101, %v182
    %v190 = vmul.f32 %v102, %v182
    %v191 = vmul.f32 %v103, %v182
    %v192 = vmul.f32 %v104, %v183
    %v193 = vmul.f32 %v105, %v183
    %v194 = vmul.f32 %v106, %v183
    %v195 = vmul.f32 %v107, %v183
    %v196 = vmul.f32 %v108, %v183
    %v197 = vmul.f32 %v109, %v183
    %v198 = vmul.f32 %v110, %v184
    %v199 = vmul.f32 %v111, %v184
    %v200 = vmul.f32 %v112, %v184
    %v201 = vmul.f32 %v113, %v184
    %v202 = vmul.f32 %v114, %v184
    %v203 = vmul.f32 %v115, %v184
    %v204 = vmul.f32 %v116, %v185
    %v205 = vmul.f32 %v117, %v185
    %v206 = vmul.f32 %v118, %v185
    %v207 = vmul.f32 %v119, %v185
    %v208 = vmul.f32 %v120, %v185
    %v209 = vmul.f32 %v121, %v185
    %v210 = vld [vmem:[#allocation5] sm:$0x3f]
    %v212 = vlaneseq
    %v213 = vshrl.u32 %v212, 7
    %v214 = vsub.s32 0, %v213
    %v215 = vrot.slane %v210, %v214
    %v216 = vlaneseq
    %v217 = vshrl.u32 %v216, 7
    %v218 = vsub.s32 1, %v217
    %v219 = vrot.slane %v210, %v218
    %v220 = vlaneseq
    %v221 = vshrl.u32 %v220, 7
    %v222 = vsub.s32 2, %v221
    %v223 = vrot.slane %v210, %v222
    %v224 = vlaneseq
    %v225 = vshrl.u32 %v224, 7
    %v226 = vsub.s32 3, %v225
    %v227 = vrot.slane %v210, %v226
    %v228 = vlaneseq
    %v229 = vshrl.u32 %v228, 7
    %v230 = vsub.s32 4, %v229
    %v231 = vrot.slane %v210, %v230
    %v232 = vlaneseq
    %v233 = vshrl.u32 %v232, 7
    %v234 = vsub.s32 5, %v233
    %v235 = vrot.slane %v210, %v234
    %v242 = vmul.f32 %v186, %v215
    %v243 = vmul.f32 %v187, %v219
    %v244 = vmul.f32 %v188, %v223
    %v245 = vmul.f32 %v189, %v227
    %v246 = vmul.f32 %v190, %v231
    %v247 = vmul.f32 %v191, %v235
    %v248 = vmul.f32 %v192, %v215
    %v249 = vmul.f32 %v193, %v219
    %v250 = vmul.f32 %v194, %v223
    %v251 = vmul.f32 %v195, %v227
    %v252 = vmul.f32 %v196, %v231
    %v253 = vmul.f32 %v197, %v235
    %v254 = vmul.f32 %v198, %v215
    %v255 = vmul.f32 %v199, %v219
    %v256 = vmul.f32 %v200, %v223
    %v257 = vmul.f32 %v201, %v227
    %v258 = vmul.f32 %v202, %v231
    %v259 = vmul.f32 %v203, %v235
    %v260 = vmul.f32 %v204, %v215
    %v261 = vmul.f32 %v205, %v219
    %v262 = vmul.f32 %v206, %v223
    %v263 = vmul.f32 %v207, %v227
    %v264 = vmul.f32 %v208, %v231
    %v265 = vmul.f32 %v209, %v235
    %v266 = vld [vmem:[%s2] sm:$0x3f]
    %v268 = vlaneseq
    %v269 = vshrl.u32 %v268, 7
    %v270 = vsub.s32 0, %v269
    %v271 = vrot.slane %v266, %v270
    %v272 = vlaneseq
    %v273 = vshrl.u32 %v272, 7
    %v274 = vsub.s32 1, %v273
    %v275 = vrot.slane %v266, %v274
    %v276 = vlaneseq
    %v277 = vshrl.u32 %v276, 7
    %v278 = vsub.s32 2, %v277
    %v279 = vrot.slane %v266, %v278
    %v280 = vlaneseq
    %v281 = vshrl.u32 %v280, 7
    %v282 = vsub.s32 3, %v281
    %v283 = vrot.slane %v266, %v282
    %v284 = vlaneseq
    %v285 = vshrl.u32 %v284, 7
    %v286 = vsub.s32 4, %v285
    %v287 = vrot.slane %v266, %v286
    %v288 = vlaneseq
    %v289 = vshrl.u32 %v288, 7
    %v290 = vsub.s32 5, %v289
    %v291 = vrot.slane %v266, %v290
    %v298 = vadd.f32 %v242, %v271
    %v299 = vadd.f32 %v243, %v275
    %v300 = vadd.f32 %v244, %v279
    %v301 = vadd.f32 %v245, %v283
    %v302 = vadd.f32 %v246, %v287
    %v303 = vadd.f32 %v247, %v291
    %v304 = vadd.f32 %v248, %v271
    %v305 = vadd.f32 %v249, %v275
    %v306 = vadd.f32 %v250, %v279
    %v307 = vadd.f32 %v251, %v283
    %v308 = vadd.f32 %v252, %v287
    %v309 = vadd.f32 %v253, %v291
    %v310 = vadd.f32 %v254, %v271
    %v311 = vadd.f32 %v255, %v275
    %v312 = vadd.f32 %v256, %v279
    %v313 = vadd.f32 %v257, %v283
    %v314 = vadd.f32 %v258, %v287
    %v315 = vadd.f32 %v259, %v291
    %v316 = vadd.f32 %v260, %v271
    %v317 = vadd.f32 %v261, %v275
    %v318 = vadd.f32 %v262, %v279
    %v319 = vadd.f32 %v263, %v283
    %v320 = vadd.f32 %v264, %v287
    %v321 = vadd.f32 %v265, %v291
    %v322 = vpack.c.bf16 %v304, %v298
    %v323 = vpack.c.bf16 %v305, %v299
    %v324 = vpack.c.bf16 %v306, %v300
    %v325 = vpack.c.bf16 %v307, %v301
    %v326 = vpack.c.bf16 %v308, %v302
    %v327 = vpack.c.bf16 %v309, %v303
    %v328 = vpack.c.bf16 %v316, %v310
    %v329 = vpack.c.bf16 %v317, %v311
    %v330 = vpack.c.bf16 %v318, %v312
    %v331 = vpack.c.bf16 %v319, %v313
    %v332 = vpack.c.bf16 %v320, %v314
    %v333 = vpack.c.bf16 %v321, %v315
    %v346 = vunpack.c.l.b16 %v322
    %v347 = vunpack.c.l.b16 %v323
    %v348 = vunpack.c.l.b16 %v324
    %v349 = vunpack.c.l.b16 %v325
    %v350 = vunpack.c.l.b16 %v326
    %v351 = vunpack.c.l.b16 %v327
    %v352 = vunpack.c.h.b16 %v322
    %v353 = vunpack.c.h.b16 %v323
    %v354 = vunpack.c.h.b16 %v324
    %v355 = vunpack.c.h.b16 %v325
    %v356 = vunpack.c.h.b16 %v326
    %v357 = vunpack.c.h.b16 %v327
    %v358 = vunpack.c.l.b16 %v328
    %v359 = vunpack.c.l.b16 %v329
    %v360 = vunpack.c.l.b16 %v330
    %v361 = vunpack.c.l.b16 %v331
    %v362 = vunpack.c.l.b16 %v332
    %v363 = vunpack.c.l.b16 %v333
    %v364 = vunpack.c.h.b16 %v328
    %v365 = vunpack.c.h.b16 %v329
    %v366 = vunpack.c.h.b16 %v330
    %v367 = vunpack.c.h.b16 %v331
    %v368 = vunpack.c.h.b16 %v332
    %v369 = vunpack.c.h.b16 %v333
    %v370 = vpack.c.b16 %v347, %v346
    %v371 = vpack.c.b16 %v349, %v348
    %v372 = vpack.c.b16 %v351, %v350
    %v373 = vpack.c.b16 %v353, %v352
    %v374 = vpack.c.b16 %v355, %v354
    %v375 = vpack.c.b16 %v357, %v356
    %v376 = vpack.c.b16 %v359, %v358
    %v377 = vpack.c.b16 %v361, %v360
    %v378 = vpack.c.b16 %v363, %v362
    %v379 = vpack.c.b16 %v365, %v364
    %v380 = vpack.c.b16 %v367, %v366
    %v381 = vpack.c.b16 %v369, %v368
    %394 = vst [vmem:[#allocation7] sm:$0xff] %v370
    %395 = vst [vmem:[#allocation7 + $0x8] sm:$0xff] %v371
    %396 = vst [vmem:[#allocation7 + $0x10] sm:$0xff] %v372
    %397 = vst [vmem:[#allocation7 + $0x18] sm:$0xff] %v373
    %398 = vst [vmem:[#allocation7 + $0x20] sm:$0xff] %v374
    %399 = vst [vmem:[#allocation7 + $0x28] sm:$0xff] %v375
    %400 = vst [vmem:[#allocation7 + $0x30] sm:$0xff] %v376
    %401 = vst [vmem:[#allocation7 + $0x38] sm:$0xff] %v377
    %402 = vst [vmem:[#allocation7 + $0x40] sm:$0xff] %v378
    %403 = vst [vmem:[#allocation7 + $0x48] sm:$0xff] %v379
    %404 = vst [vmem:[#allocation7 + $0x50] sm:$0xff] %v380
    %405 = vst [vmem:[#allocation7 + $0x58] sm:$0xff] %v381
    // Predicated region
    $region22: #{tpu_custom_call.1} parent=1 // pred_check
      _
    $region23: #{tpu_custom_call.1} parent=1 // pred_check_branch
      %407 = sbr.rel (0) target = $region25
    $region24: #{tpu_custom_call.1} parent=1 // pred_region
      %s409 = ssub.s32 1536, 1536
      %410 = vsyncadd [#allocation4], %s409
      %s411 = sshll.u32 [#allocation7], 4
      %s412 = int_to_ptr.vmem [resolvable:$true] %s411
      %417 = dma.vmem_to_hbm [thread:$0]  %s412, 1536, %s3, [#allocation4], 384, 384, 24
    $region25: #{tpu_custom_call.1} parent=1 // pred_fallthru
      _
    // Predicated region
    $region26: #{tpu_custom_call.1} parent=1 // pred_check
      _
    $region27: #{tpu_custom_call.1} parent=1 // pred_check_branch
      %419 = sbr.rel (0) target = $region29
    $region28: #{tpu_custom_call.1} parent=1 // pred_region
      %420 = dma.done [#allocation4], 1536
    $region29: #{tpu_custom_call.1} parent=1 // pred_fallthru
      _
    %421 = vsyncpa [#allocation3], 1
    %422 = vsyncpa [#allocation6], 1
    %423 = vsyncpa [#allocation4], 1

</llo_original>
